<compile_context>
chip_gen: v6e
topology: v6e:2x2x1
jax: 0.10.0
libtpu: 0.0.40
codegen_flags: <defaults>
</compile_context>

<pallas_src>
import jax
import jax.numpy as jnp
from jax.experimental import pallas as pl
from jax.experimental.pallas import tpu as pltpu


def _copy_hbm_kernel(w_hbm_ref, o_hbm_ref, copy_sem):
    # Single whole-table HBM->HBM DMA: one read + one write, no VMEM staging.
    cp = pltpu.make_async_copy(w_hbm_ref, o_hbm_ref, copy_sem)
    cp.start()
    cp.wait()


def default_query_encoding(query_embed_weight, targets=None):
    """Forward pass of DefaultQueryEncoding.

    Args:
      query_embed_weight: (num_queries, hidden_dim) embedding table.
      targets: ignored (kept for API parity with the PyTorch module).

    Returns:
      (num_queries, hidden_dim) array equal to the embedding weight.
    """
    # Zero-cost alternative (preferred when a kernel is not required):
    #   return query_embed_weight
    num_queries, hidden_dim = query_embed_weight.shape
    dtype_bytes = jnp.dtype(query_embed_weight.dtype).itemsize

    return pl.pallas_call(
        _copy_hbm_kernel,
        out_shape=jax.ShapeDtypeStruct((num_queries, hidden_dim),
                                       query_embed_weight.dtype),
        in_specs=[pl.BlockSpec(memory_space=pl.ANY)],   # raw HBM ref, no auto-DMA
        out_specs=pl.BlockSpec(memory_space=pl.ANY),    # raw HBM ref, no auto-DMA
        scratch_shapes=[pltpu.SemaphoreType.DMA],
        cost_estimate=pl.CostEstimate(
            flops=0,
            transcendentals=0,
            bytes_accessed=2 * num_queries * hidden_dim * dtype_bytes),
    )(query_embed_weight)


if __name__ == "__main__":
    # Deterministic parameter init (synthetic; mirrors nn.Embedding's shape).
    num_queries = 8
    hidden_dim = 32
    key = jax.random.PRNGKey(0)
    # nn.Embedding default init is N(0, 1).
    query_embed_weight = jax.random.normal(
        key, (num_queries, hidden_dim), dtype=jnp.float32)

    # `targets` is ignored by the module's forward; pass a dummy.
    targets = None

    out = default_query_encoding(query_embed_weight, targets)
    out = jax.block_until_ready(out)

    assert out.shape == (num_queries, hidden_dim)
    assert out.dtype == jnp.float32
    assert bool(jnp.allclose(out, query_embed_weight)), "output != weight"

    print("KERNEL_OK")
</pallas_src>

<mosaic_0001>
module attributes {stable_mosaic.version = 11 : i64} {
  func.func @_copy_hbm_kernel(%arg0: memref<8x32xf32, #tpu.memory_space<any>>, %arg1: memref<8x32xf32, #tpu.memory_space<any>>, %arg2: memref<!tpu.dma_semaphore, #tpu.memory_space<semaphore_mem>>) attributes {dimension_semantics = [], scalar_prefetch = 0 : i64, scratch_operands = 1 : i64, tpu.core_type = #tpu.core_type<tc>} {
    tpu.enqueue_dma source(%arg0 : memref<8x32xf32, #tpu.memory_space<any>>) target(%arg1 : memref<8x32xf32, #tpu.memory_space<any>>) target_semaphore(%arg2 : memref<!tpu.dma_semaphore, #tpu.memory_space<semaphore_mem>>)
    tpu.wait_dma2 semaphore(%arg2 : memref<!tpu.dma_semaphore, #tpu.memory_space<semaphore_mem>>) src(%arg0 : memref<8x32xf32, #tpu.memory_space<any>>) dst(%arg1 : memref<8x32xf32, #tpu.memory_space<any>>)
    return
  }
}

</mosaic_0001>

<llo_original>
// kernel: tpu_custom_call.1
$region0: #{tpu_custom_call.1}
  #allocation0 [shape = 'u32[]', space=smem, size = 0x4, offset = 0x4, fixed_abs, tag = 'smem constant byte address 0x4 - core index']
  #allocation1 [shape = 'u32[144,128]{1,0:T(1,128)}', space=vmem, size = 0x12000, scoped, tag = 'internal scratch']
  #allocation2 [shape = 's32[1]{0}', space=sflag, size = 0x4, scoped, tag = 'scratch operand']
  #allocation3 [shape = 's32[]', space=sflag, size = 0x4, offset = 0, fixed_abs, tag = 'sflag constant byte address 0x0 - dummy sync flag']
  #allocation4 [shape = 'u32[0]{0}', space=smem, size = 0, offset = 0, fixed_abs, tag = 'smem constant byte address 0x0 - null']
  %s0 = inlined_call_operand.hbm [shape: f32[8,32], index: 0, kind: input, shape index: {}]
  %s1 = inlined_call_operand.hbm [shape: f32[8,32], index: 1, kind: output, shape index: {}]
  %s2 = sld [smem:[#allocation0]]
  $region2: #{tpu_custom_call.1} parent=0
    _
  %s4 = ssub.s32 1, %s2
  %s5 = scalar_select 0, %s4, %s2
  %s7 = sshll.u32 1, 14
  %s8 = sxor.u32 4294967295, %s7
  %12 = dma.general %s0, 128, %s1, [#allocation2], 131072, [#allocation4], 0, 0
  %s13 = smul.u32 8, 1
  %s14 = sshll.u32 %s13, 4
  %15 = dma.done [#allocation2], %s14
  %16 = vsyncmov [#allocation2]
  %s17 = vpop.sfrf %16
  %p18 = scmp.eq.s32.totalorder %s17, 0
  %p19 = pneg %p18
  %21 = shalt.err (%p19)

</llo_original>
